<compile_context>
chip_gen: v5e
topology: v5e:2x2
jax: 0.10.0
libtpu: 0.0.40
codegen_flags: <defaults>
</compile_context>

<pallas_src>
import jax
import jax.numpy as jnp
from jax.experimental import pallas as pl
from jax.experimental.pallas import tpu as pltpu


def _mlp_kernel(x_ref, w1_ref, b1_ref, w2_ref, b2_ref, w3_ref, b3_ref,
                x1_ref, x2_ref, x3_ref):
    x = x_ref[...]

    # fc1 + relu  (dropout = identity, eval semantics)
    h1 = jnp.dot(x, w1_ref[...], preferred_element_type=jnp.float32) + b1_ref[...]
    h1 = jnp.maximum(h1, 0.0)
    x1_ref[...] = h1.astype(x1_ref.dtype)

    # fc2 + relu  (dropout = identity, eval semantics)
    h2 = jnp.dot(h1, w2_ref[...], preferred_element_type=jnp.float32) + b2_ref[...]
    h2 = jnp.maximum(h2, 0.0)
    x2_ref[...] = h2.astype(x2_ref.dtype)

    # fc3 + softmax over the last axis
    h3 = jnp.dot(h2, w3_ref[...], preferred_element_type=jnp.float32) + b3_ref[...]
    m = jnp.max(h3, axis=-1, keepdims=True)
    e = jnp.exp(h3 - m)
    denom = jnp.sum(e, axis=-1, keepdims=True)
    inv = pl.reciprocal(denom, approx=True)        # EUP vrcp (otherwise-idle slot)
    inv = inv * (2.0 - denom * inv)                # one Newton step -> ~f32 accuracy
    x3_ref[...] = (e * inv).astype(x3_ref.dtype)


def _round_up(x, m):
    return ((x + m - 1) // m) * m


def prepare_params(params):
    """Hoist (out,in)->(in,out) transposes and bias reshapes off the hot path."""
    w1, b1, w2, b2, w3, b3 = params
    return (jnp.asarray(w1).T, jnp.asarray(b1).reshape(1, -1),
            jnp.asarray(w2).T, jnp.asarray(b2).reshape(1, -1),
            jnp.asarray(w3).T, jnp.asarray(b3).reshape(1, -1))


def linear_3_forward(x, prepared_params, *, tile_m=None):
    """x: [N, C_in] float32.  prepared_params: output of prepare_params()."""
    w1t, b1r, w2t, b2r, w3t, b3r = prepared_params
    n, c_in = x.shape
    h1, h2, c_out = w1t.shape[1], w2t.shape[1], w3t.shape[1]

    # Large MXU-friendly batch tiles (multiple of 256 rows for the 256-row
    # v6e/v7x MXU, which is also a multiple of 128 for v5e).  Per-row VMEM
    # footprint is ~1 KiB, so 2048-row tiles double-buffered stay well under
    # the 32 MiB scoped-VMEM default on every generation (incl. v7x, 64 MiB
    # physical).  Keep >=2 grid steps when the batch allows so v7x's two
    # TensorCores both get work through the "parallel" grid axis.
    if tile_m is None:
        tile_m = min(2048, _round_up(pl.cdiv(n, 2), 256)) if n > 256 else 256
    else:
        tile_m = _round_up(max(tile_m, 8), 256)

    # Ragged batch: pad with zeros, slice results back afterwards.
    n_pad = _round_up(n, tile_m)
    if n_pad != n:
        x = jnp.pad(x, ((0, n_pad - n), (0, 0)))

    grid = (n_pad // tile_m,)

    x_spec = pl.BlockSpec((tile_m, c_in), lambda i: (i, 0))
    rep = lambda shape: pl.BlockSpec(shape, lambda i: (0, 0))  # replicated weights

    out_shapes = (
        jax.ShapeDtypeStruct((n_pad, h1), jnp.float32),
        jax.ShapeDtypeStruct((n_pad, h2), jnp.float32),
        jax.ShapeDtypeStruct((n_pad, c_out), jnp.float32),
    )
    out_specs = (
        pl.BlockSpec((tile_m, h1), lambda i: (i, 0)),
        pl.BlockSpec((tile_m, h2), lambda i: (i, 0)),
        pl.BlockSpec((tile_m, c_out), lambda i: (i, 0)),
    )

    x1p, x2p, x3p = pl.pallas_call(
        _mlp_kernel,
        out_shape=out_shapes,
        grid_spec=pl.GridSpec(
            grid=grid,
            in_specs=[
                x_spec,
                rep((c_in, h1)), rep((1, h1)),
                rep((h1, h2)), rep((1, h2)),
                rep((h2, c_out)), rep((1, c_out)),
            ],
            out_specs=out_specs,
        ),
        compiler_params=pltpu.CompilerParams(
            dimension_semantics=("parallel",)),
    )(x, w1t, b1r, w2t, b2r, w3t, b3r)

    if n_pad != n:
        x1p, x2p, x3p = x1p[:n], x2p[:n], x3p[:n]
    return x1p, x2p, x3p


def init_params(key, input_channel, output_channel):
    """Deterministic synthetic init, PyTorch nn.Linear weight layout (out, in)."""
    ks = jax.random.split(key, 6)

    def linear_init(kw, kb, fan_in, fan_out):
        bound = 1.0 / jnp.sqrt(fan_in)
        w = jax.random.uniform(kw, (fan_out, fan_in), jnp.float32, -bound, bound)
        b = jax.random.uniform(kb, (fan_out,), jnp.float32, -bound, bound)
        return w, b

    w1, b1 = linear_init(ks[0], ks[1], input_channel, 128)
    w2, b2 = linear_init(ks[2], ks[3], 128, 64)
    w3, b3 = linear_init(ks[4], ks[5], 64, output_channel)
    return (w1, b1, w2, b2, w3, b3)


def _reference(x, params):
    w1, b1, w2, b2, w3, b3 = params
    x1 = jnp.maximum(x @ w1.T + b1, 0.0)
    x2 = jnp.maximum(x1 @ w2.T + b2, 0.0)
    x3 = jax.nn.softmax(x2 @ w3.T + b3, axis=-1)
    return x1, x2, x3


if __name__ == "__main__":
    key = jax.random.PRNGKey(0)
    k_in, k_p = jax.random.split(key)

    batch, input_channel, output_channel = 16, 32, 16
    x = jax.random.normal(k_in, (batch, input_channel), jnp.float32)
    params = init_params(k_p, input_channel, output_channel)
    prepared = prepare_params(params)

    x1, x2, x3 = linear_3_forward(x, prepared)
    jax.block_until_ready((x1, x2, x3))

    r1, r2, r3 = _reference(x, params)
    assert x1.shape == r1.shape and x2.shape == r2.shape and x3.shape == r3.shape
    assert jnp.allclose(x1, r1, atol=1e-5, rtol=1e-5)
    assert jnp.allclose(x2, r2, atol=1e-5, rtol=1e-5)
    # Softmax denominator uses EUP approx reciprocal + one Newton refinement;
    # allow a slightly looser (still tight) tolerance for x3.
    assert jnp.allclose(x3, r3, atol=1e-4, rtol=1e-4)

    print("KERNEL_OK")
</pallas_src>

<mosaic_0001>
module attributes {stable_mosaic.version = 11 : i64} {
  func.func @_mlp_kernel(%arg0: i32, %arg1: memref<256x32xf32, #tpu.memory_space<vmem>>, %arg2: memref<32x128xf32, #tpu.memory_space<vmem>>, %arg3: memref<1x128xf32, #tpu.memory_space<vmem>>, %arg4: memref<128x64xf32, #tpu.memory_space<vmem>>, %arg5: memref<1x64xf32, #tpu.memory_space<vmem>>, %arg6: memref<64x16xf32, #tpu.memory_space<vmem>>, %arg7: memref<1x16xf32, #tpu.memory_space<vmem>>, %arg8: memref<256x128xf32, #tpu.memory_space<vmem>>, %arg9: memref<256x64xf32, #tpu.memory_space<vmem>>, %arg10: memref<256x16xf32, #tpu.memory_space<vmem>>) attributes {dimension_semantics = [#tpu.dimension_semantics<parallel>], iteration_bounds = array<i64: 1>, scalar_prefetch = 0 : i64, scratch_operands = 0 : i64, tpu.core_type = #tpu.core_type<tc>, window_params = [{transform_indices = @transform_0, window_bounds = array<i64: 256, 32>}, {pipeline_mode = #tpu.pipeline_mode<synchronous>, transform_indices = @transform_1, window_bounds = array<i64: 32, 128>}, {pipeline_mode = #tpu.pipeline_mode<synchronous>, transform_indices = @transform_2, window_bounds = array<i64: 1, 128>}, {pipeline_mode = #tpu.pipeline_mode<synchronous>, transform_indices = @transform_3, window_bounds = array<i64: 128, 64>}, {pipeline_mode = #tpu.pipeline_mode<synchronous>, transform_indices = @transform_4, window_bounds = array<i64: 1, 64>}, {pipeline_mode = #tpu.pipeline_mode<synchronous>, transform_indices = @transform_5, window_bounds = array<i64: 64, 16>}, {pipeline_mode = #tpu.pipeline_mode<synchronous>, transform_indices = @transform_6, window_bounds = array<i64: 1, 16>}, {transform_indices = @transform_7, window_bounds = array<i64: 256, 128>}, {transform_indices = @transform_8, window_bounds = array<i64: 256, 64>}, {transform_indices = @transform_9, window_bounds = array<i64: 256, 16>}]} {
    %c0 = arith.constant 0 : index
    %c0_0 = arith.constant 0 : index
    %0 = vector.load %arg1[%c0, %c0_0] : memref<256x32xf32, #tpu.memory_space<vmem>>, vector<256x32xf32>
    %c0_1 = arith.constant 0 : index
    %c0_2 = arith.constant 0 : index
    %1 = vector.load %arg2[%c0_1, %c0_2] : memref<32x128xf32, #tpu.memory_space<vmem>>, vector<32x128xf32>
    %cst = arith.constant dense<0.000000e+00> : vector<256x128xf32>
    %2 = tpu.matmul %0, %1, %cst {dimension_numbers = #tpu.dot_dimension_numbers<[1], [0], [0], [1], [0, 0, 1, 1], [], []>} : vector<256x32xf32>, vector<32x128xf32>, vector<256x128xf32> -> vector<256x128xf32>
    %c0_3 = arith.constant 0 : index
    %c0_4 = arith.constant 0 : index
    %3 = vector.load %arg3[%c0_3, %c0_4] : memref<1x128xf32, #tpu.memory_space<vmem>>, vector<1x128xf32>
    %4 = vector.broadcast %3 : vector<1x128xf32> to vector<256x128xf32>
    %5 = arith.addf %2, %4 : vector<256x128xf32>
    %cst_5 = arith.constant 0.000000e+00 : f32
    %6 = vector.broadcast %cst_5 : f32 to vector<256x128xf32>
    %7 = arith.maximumf %5, %6 : vector<256x128xf32>
    %c0_6 = arith.constant 0 : index
    %c0_7 = arith.constant 0 : index
    %8 = vector.load %arg8[%c0_6, %c0_7] : memref<256x128xf32, #tpu.memory_space<vmem>>, vector<256x128xf32>
    tpu.vector_store %arg8[%c0_6, %c0_7], %7 {strides = array<i32>} : memref<256x128xf32, #tpu.memory_space<vmem>>, vector<256x128xf32>,
    %c0_8 = arith.constant 0 : index
    %c0_9 = arith.constant 0 : index
    %9 = vector.load %arg4[%c0_8, %c0_9] : memref<128x64xf32, #tpu.memory_space<vmem>>, vector<128x64xf32>
    %cst_10 = arith.constant dense<0.000000e+00> : vector<256x64xf32>
    %10 = tpu.matmul %7, %9, %cst_10 {dimension_numbers = #tpu.dot_dimension_numbers<[1], [0], [0], [1], [0, 0, 1, 1], [], []>} : vector<256x128xf32>, vector<128x64xf32>, vector<256x64xf32> -> vector<256x64xf32>
    %c0_11 = arith.constant 0 : index
    %c0_12 = arith.constant 0 : index
    %11 = vector.load %arg5[%c0_11, %c0_12] : memref<1x64xf32, #tpu.memory_space<vmem>>, vector<1x64xf32>
    %12 = vector.broadcast %11 : vector<1x64xf32> to vector<256x64xf32>
    %13 = arith.addf %10, %12 : vector<256x64xf32>
    %cst_13 = arith.constant 0.000000e+00 : f32
    %14 = vector.broadcast %cst_13 : f32 to vector<256x64xf32>
    %15 = arith.maximumf %13, %14 : vector<256x64xf32>
    %c0_14 = arith.constant 0 : index
    %c0_15 = arith.constant 0 : index
    %16 = vector.load %arg9[%c0_14, %c0_15] : memref<256x64xf32, #tpu.memory_space<vmem>>, vector<256x64xf32>
    tpu.vector_store %arg9[%c0_14, %c0_15], %15 {strides = array<i32>} : memref<256x64xf32, #tpu.memory_space<vmem>>, vector<256x64xf32>,
    %c0_16 = arith.constant 0 : index
    %c0_17 = arith.constant 0 : index
    %17 = vector.load %arg6[%c0_16, %c0_17] : memref<64x16xf32, #tpu.memory_space<vmem>>, vector<64x16xf32>
    %cst_18 = arith.constant dense<0.000000e+00> : vector<256x16xf32>
    %18 = tpu.matmul %15, %17, %cst_18 {dimension_numbers = #tpu.dot_dimension_numbers<[1], [0], [0], [1], [0, 0, 1, 1], [], []>} : vector<256x64xf32>, vector<64x16xf32>, vector<256x16xf32> -> vector<256x16xf32>
    %c0_19 = arith.constant 0 : index
    %c0_20 = arith.constant 0 : index
    %19 = vector.load %arg7[%c0_19, %c0_20] : memref<1x16xf32, #tpu.memory_space<vmem>>, vector<1x16xf32>
    %20 = vector.broadcast %19 : vector<1x16xf32> to vector<256x16xf32>
    %21 = arith.addf %18, %20 : vector<256x16xf32>
    %cst_21 = arith.constant dense<0xFF800000> : vector<256xf32>
    %22 = vector.multi_reduction <maximumf>, %21, %cst_21 [1] : vector<256x16xf32> to vector<256xf32>
    %23 = vector.shape_cast %22 : vector<256xf32> to vector<256x1xf32>
    %24 = vector.broadcast %23 : vector<256x1xf32> to vector<256x16xf32>
    %25 = arith.subf %21, %24 : vector<256x16xf32>
    %26 = math.exp %25 : vector<256x16xf32>
    %cst_22 = arith.constant dense<0.000000e+00> : vector<256xf32>
    %27 = vector.multi_reduction <add>, %26, %cst_22 [1] : vector<256x16xf32> to vector<256xf32>
    %28 = vector.shape_cast %27 : vector<256xf32> to vector<256x1xf32>
    %29 = tpu.reciprocal %28 {approx = true} : vector<256x1xf32> -> vector<256x1xf32>
    %30 = arith.mulf %28, %29 : vector<256x1xf32>
    %cst_23 = arith.constant 2.000000e+00 : f32
    %31 = vector.broadcast %cst_23 : f32 to vector<256x1xf32>
    %32 = arith.subf %31, %30 : vector<256x1xf32>
    %33 = arith.mulf %29, %32 : vector<256x1xf32>
    %34 = vector.broadcast %33 : vector<256x1xf32> to vector<256x16xf32>
    %35 = arith.mulf %26, %34 : vector<256x16xf32>
    %c0_24 = arith.constant 0 : index
    %c0_25 = arith.constant 0 : index
    %36 = vector.load %arg10[%c0_24, %c0_25] : memref<256x16xf32, #tpu.memory_space<vmem>>, vector<256x16xf32>
    tpu.vector_store %arg10[%c0_24, %c0_25], %35 {strides = array<i32>} : memref<256x16xf32, #tpu.memory_space<vmem>>, vector<256x16xf32>,
    return
  }
  func.func @transform_0(%arg0: i32) -> (i32, i32) {
    %c0_i32 = arith.constant 0 : i32
    %c0_i32_0 = arith.constant 0 : i32
    return %arg0, %c0_i32 : i32, i32
  }
  func.func @transform_1(%arg0: i32) -> (i32, i32) {
    %c0_i32 = arith.constant 0 : i32
    %c0_i32_0 = arith.constant 0 : i32
    %c0_i32_1 = arith.constant 0 : i32
    return %c0_i32, %c0_i32_0 : i32, i32
  }
  func.func @transform_2(%arg0: i32) -> (i32, i32) {
    %c0_i32 = arith.constant 0 : i32
    %c0_i32_0 = arith.constant 0 : i32
    %c0_i32_1 = arith.constant 0 : i32
    return %c0_i32, %c0_i32_0 : i32, i32
  }
  func.func @transform_3(%arg0: i32) -> (i32, i32) {
    %c0_i32 = arith.constant 0 : i32
    %c0_i32_0 = arith.constant 0 : i32
    %c0_i32_1 = arith.constant 0 : i32
    return %c0_i32, %c0_i32_0 : i32, i32
  }
  func.func @transform_4(%arg0: i32) -> (i32, i32) {
    %c0_i32 = arith.constant 0 : i32
    %c0_i32_0 = arith.constant 0 : i32
    %c0_i32_1 = arith.constant 0 : i32
    return %c0_i32, %c0_i32_0 : i32, i32
  }
  func.func @transform_5(%arg0: i32) -> (i32, i32) {
    %c0_i32 = arith.constant 0 : i32
    %c0_i32_0 = arith.constant 0 : i32
    %c0_i32_1 = arith.constant 0 : i32
    return %c0_i32, %c0_i32_0 : i32, i32
  }
  func.func @transform_6(%arg0: i32) -> (i32, i32) {
    %c0_i32 = arith.constant 0 : i32
    %c0_i32_0 = arith.constant 0 : i32
    %c0_i32_1 = arith.constant 0 : i32
    return %c0_i32, %c0_i32_0 : i32, i32
  }
  func.func @transform_7(%arg0: i32) -> (i32, i32) {
    %c0_i32 = arith.constant 0 : i32
    %c0_i32_0 = arith.constant 0 : i32
    return %arg0, %c0_i32 : i32, i32
  }
  func.func @transform_8(%arg0: i32) -> (i32, i32) {
    %c0_i32 = arith.constant 0 : i32
    %c0_i32_0 = arith.constant 0 : i32
    return %arg0, %c0_i32 : i32, i32
  }
  func.func @transform_9(%arg0: i32) -> (i32, i32) {
    %c0_i32 = arith.constant 0 : i32
    %c0_i32_0 = arith.constant 0 : i32
    return %arg0, %c0_i32 : i32, i32
  }
}

</mosaic_0001>

<llo_original>
// kernel: tpu_custom_call.1
$region0: #{tpu_custom_call.1}
  #allocation0 [shape = 'u32[]', space=smem, size = 0x4, offset = 0x4, fixed_abs, tag = 'smem constant byte address 0x4 - core index']
  #allocation1 [shape = 'u32[72,128]{1,0:T(1,128)}', space=vmem, size = 0x9000, scoped, tag = 'internal scratch']
  %s0 = inlined_call_operand.vmem [shape: f32[256,32], index: 0, kind: input, shape index: {}]
  %s1 = inlined_call_operand.vmem [shape: f32[32,128], index: 1, kind: input, shape index: {}]
  %s2 = inlined_call_operand.vmem [shape: f32[1,128], index: 2, kind: input, shape index: {}]
  %s3 = inlined_call_operand.vmem [shape: f32[128,64], index: 3, kind: input, shape index: {}]
  %s4 = inlined_call_operand.vmem [shape: f32[1,64], index: 4, kind: input, shape index: {}]
  %s5 = inlined_call_operand.vmem [shape: f32[64,16], index: 5, kind: input, shape index: {}]
  %s6 = inlined_call_operand.vmem [shape: f32[1,16], index: 6, kind: input, shape index: {}]
  %s7 = inlined_call_operand.hbm [shape: f32[256,128], index: 7, kind: output, shape index: {0}]
  %s8 = inlined_call_operand.vmem [shape: f32[256,64], index: 8, kind: output, shape index: {1}]
  %s9 = inlined_call_operand.vmem [shape: f32[256,16], index: 9, kind: output, shape index: {2}]
  %10 = xla_tuple %s7, %s8, %s9
  %s11 = sld [smem:[#allocation0]]
  $region54: #{tpu_custom_call.1} parent=0
    _
  %s13 = ssub.s32 1, %s11
  %s14 = scalar_select 0, %s13, %s11
  $region1: #{tpu_custom_call.1} parent=0
    #allocation2 [shape = 'u8[131072]{0}', space=vmem, size = 0x20000, scoped, tag = 'output window, operand 0, single buffered']
    #allocation3 [shape = 's32[1]{0}', space=sflag, size = 0x4, scoped, tag = 'scoped memory for tpu_custom_call.1']
    %15 = vsyncpa [#allocation3], 0
    // Predicated region
    $region2: #{tpu_custom_call.1} parent=1 // pred_check
      _
    $region3: #{tpu_custom_call.1} parent=1 // pred_check_branch
      %17 = sbr.rel (0) target = $region5
    $region4: #{tpu_custom_call.1} parent=1 // pred_region
      _
    $region5: #{tpu_custom_call.1} parent=1 // pred_fallthru
      _
    // Predicated region
    $region6: #{tpu_custom_call.1} parent=1 // pred_check
      _
    $region7: #{tpu_custom_call.1} parent=1 // pred_check_branch
      %19 = sbr.rel (0) target = $region9
    $region8: #{tpu_custom_call.1} parent=1 // pred_region
      _
    $region9: #{tpu_custom_call.1} parent=1 // pred_fallthru
      _
    // Predicated region
    $region10: #{tpu_custom_call.1} parent=1 // pred_check
      _
    $region11: #{tpu_custom_call.1} parent=1 // pred_check_branch
      %21 = sbr.rel (0) target = $region13
    $region12: #{tpu_custom_call.1} parent=1 // pred_region
      _
    $region13: #{tpu_custom_call.1} parent=1 // pred_fallthru
      _
    // Predicated region
    $region14: #{tpu_custom_call.1} parent=1 // pred_check
      _
    $region15: #{tpu_custom_call.1} parent=1 // pred_check_branch
      %23 = sbr.rel (0) target = $region17
    $region16: #{tpu_custom_call.1} parent=1 // pred_region
      _
    $region17: #{tpu_custom_call.1} parent=1 // pred_fallthru
      _
    // Predicated region
    $region18: #{tpu_custom_call.1} parent=1 // pred_check
      _
    $region19: #{tpu_custom_call.1} parent=1 // pred_check_branch
      %25 = sbr.rel (0) target = $region21
    $region20: #{tpu_custom_call.1} parent=1 // pred_region
      _
    $region21: #{tpu_custom_call.1} parent=1 // pred_fallthru
      _
    // Predicated region
    $region22: #{tpu_custom_call.1} parent=1 // pred_check
      _
    $region23: #{tpu_custom_call.1} parent=1 // pred_check_branch
      %27 = sbr.rel (0) target = $region25
    $region24: #{tpu_custom_call.1} parent=1 // pred_region
      _
    $region25: #{tpu_custom_call.1} parent=1 // pred_fallthru
      _
    // Predicated region
    $region26: #{tpu_custom_call.1} parent=1 // pred_check
      _
    $region27: #{tpu_custom_call.1} parent=1 // pred_check_branch
      %29 = sbr.rel (0) target = $region29
    $region28: #{tpu_custom_call.1} parent=1 // pred_region
      _
    $region29: #{tpu_custom_call.1} parent=1 // pred_fallthru
      _
    %v30 = vld [vmem:[%s0] sm:$0xff]
    %v31 = vld [vmem:[%s0 + $0x8] sm:$0xff]
    %v32 = vld [vmem:[%s0 + $0x10] sm:$0xff]
    %v33 = vld [vmem:[%s0 + $0x18] sm:$0xff]
    %v34 = vld [vmem:[%s0 + $0x20] sm:$0xff]
    %v35 = vld [vmem:[%s0 + $0x28] sm:$0xff]
    %v36 = vld [vmem:[%s0 + $0x30] sm:$0xff]
    %v37 = vld [vmem:[%s0 + $0x38] sm:$0xff]
    %v38 = vld [vmem:[%s0 + $0x40] sm:$0xff]
    %v39 = vld [vmem:[%s0 + $0x48] sm:$0xff]
    %v40 = vld [vmem:[%s0 + $0x50] sm:$0xff]
    %v41 = vld [vmem:[%s0 + $0x58] sm:$0xff]
    %v42 = vld [vmem:[%s0 + $0x60] sm:$0xff]
    %v43 = vld [vmem:[%s0 + $0x68] sm:$0xff]
    %v44 = vld [vmem:[%s0 + $0x70] sm:$0xff]
    %v45 = vld [vmem:[%s0 + $0x78] sm:$0xff]
    %v46 = vld [vmem:[%s0 + $0x80] sm:$0xff]
    %v47 = vld [vmem:[%s0 + $0x88] sm:$0xff]
    %v48 = vld [vmem:[%s0 + $0x90] sm:$0xff]
    %v49 = vld [vmem:[%s0 + $0x98] sm:$0xff]
    %v50 = vld [vmem:[%s0 + $0xa0] sm:$0xff]
    %v51 = vld [vmem:[%s0 + $0xa8] sm:$0xff]
    %v52 = vld [vmem:[%s0 + $0xb0] sm:$0xff]
    %v53 = vld [vmem:[%s0 + $0xb8] sm:$0xff]
    %v54 = vld [vmem:[%s0 + $0xc0] sm:$0xff]
    %v55 = vld [vmem:[%s0 + $0xc8] sm:$0xff]
    %v56 = vld [vmem:[%s0 + $0xd0] sm:$0xff]
    %v57 = vld [vmem:[%s0 + $0xd8] sm:$0xff]
    %v58 = vld [vmem:[%s0 + $0xe0] sm:$0xff]
    %v59 = vld [vmem:[%s0 + $0xe8] sm:$0xff]
    %v60 = vld [vmem:[%s0 + $0xf0] sm:$0xff]
    %v61 = vld [vmem:[%s0 + $0xf8] sm:$0xff]
    %v62 = vld [vmem:[%s1] sm:$0xff]
    %v63 = vld [vmem:[%s1 + $0x8] sm:$0xff]
    %v64 = vld [vmem:[%s1 + $0x10] sm:$0xff]
    %v65 = vld [vmem:[%s1 + $0x18] sm:$0xff]
    %v66 = vld [vmem:[%s2] sm:$0x1]
    %v68 = vperm.slane %v66, 0
    %vm70 = vcmask 261120
    %v72 = vsel %vm70, %v30, 0
    %v75 = vsel %vm70, %v31, 0
    %v78 = vsel %vm70, %v32, 0
    %v81 = vsel %vm70, %v33, 0
    %v84 = vsel %vm70, %v34, 0
    %v87 = vsel %vm70, %v35, 0
    %v90 = vsel %vm70, %v36, 0
    %v93 = vsel %vm70, %v37, 0
    %v96 = vsel %vm70, %v38, 0
    %v99 = vsel %vm70, %v39, 0
    %v102 = vsel %vm70, %v40, 0
    %v105 = vsel %vm70, %v41, 0
    %v108 = vsel %vm70, %v42, 0
    %v111 = vsel %vm70, %v43, 0
    %v114 = vsel %vm70, %v44, 0
    %v117 = vsel %vm70, %v45, 0
    %v120 = vsel %vm70, %v46, 0
    %v123 = vsel %vm70, %v47, 0
    %v126 = vsel %vm70, %v48, 0
    %v129 = vsel %vm70, %v49, 0
    %v132 = vsel %vm70, %v50, 0
    %v135 = vsel %vm70, %v51, 0
    %v138 = vsel %vm70, %v52, 0
    %v141 = vsel %vm70, %v53, 0
    %v144 = vsel %vm70, %v54, 0
    %v147 = vsel %vm70, %v55, 0
    %v150 = vsel %vm70, %v56, 0
    %v153 = vsel %vm70, %v57, 0
    %v156 = vsel %vm70, %v58, 0
    %v159 = vsel %vm70, %v59, 0
    %v162 = vsel %vm70, %v60, 0
    %v165 = vsel %vm70, %v61, 0
    %167 = vmatpush.msra.mxu0 0.0
    %168 = vmatpush.msra.mxu0 0.0
    %169 = vmatpush.msra.mxu0 0.0
    %170 = vmatpush.msra.mxu0 0.0
    %171 = vmatpush.msra.mxu0 0.0
    %172 = vmatpush.msra.mxu0 0.0
    %173 = vmatpush.msra.mxu0 0.0
    %174 = vmatpush.msra.mxu0 0.0
    %175 = vmatpush.msra.mxu0 0.0
    %176 = vmatpush.msra.mxu0 0.0
    %177 = vmatpush.msra.mxu0 0.0
    %178 = vmatpush.msra.mxu0 0.0
    %179 = vmatpush.msra.mxu0 %v65
    %180 = vmatpush.msra.mxu0 %v64
    %181 = vmatpush.msra.mxu0 %v63
    %182 = vmatpush.msra.mxu0 %v62
    %183 = vmatmul.f32.gmra.mxu0 %v72
    %v184 = vpop.f32.mrf.mxu0
    %v185 = vadd.f32 %v68, %v184
    %186 = vmatmul.f32.gmra.mxu0 %v75
    %v187 = vpop.f32.mrf.mxu0
    %v188 = vadd.f32 %v68, %v187
    %189 = vmatmul.f32.gmra.mxu0 %v78
    %v190 = vpop.f32.mrf.mxu0
    %v191 = vadd.f32 %v68, %v190
    %192 = vmatmul.f32.gmra.mxu0 %v81
    %v193 = vpop.f32.mrf.mxu0
    %v194 = vadd.f32 %v68, %v193
    %195 = vmatmul.f32.gmra.mxu0 %v84
    %v196 = vpop.f32.mrf.mxu0
    %v197 = vadd.f32 %v68, %v196
    %198 = vmatmul.f32.gmra.mxu0 %v87
    %v199 = vpop.f32.mrf.mxu0
    %v200 = vadd.f32 %v68, %v199
    %201 = vmatmul.f32.gmra.mxu0 %v90
    %v202 = vpop.f32.mrf.mxu0
    %v203 = vadd.f32 %v68, %v202
    %204 = vmatmul.f32.gmra.mxu0 %v93
    %v205 = vpop.f32.mrf.mxu0
    %v206 = vadd.f32 %v68, %v205
    %207 = vmatmul.f32.gmra.mxu0 %v96
    %v208 = vpop.f32.mrf.mxu0
    %v209 = vadd.f32 %v68, %v208
    %210 = vmatmul.f32.gmra.mxu0 %v99
    %v211 = vpop.f32.mrf.mxu0
    %v212 = vadd.f32 %v68, %v211
    %213 = vmatmul.f32.gmra.mxu0 %v102
    %v214 = vpop.f32.mrf.mxu0
    %v215 = vadd.f32 %v68, %v214
    %216 = vmatmul.f32.gmra.mxu0 %v105
    %v217 = vpop.f32.mrf.mxu0
    %v218 = vadd.f32 %v68, %v217
    %219 = vmatmul.f32.gmra.mxu0 %v108
    %v220 = vpop.f32.mrf.mxu0
    %v221 = vadd.f32 %v68, %v220
    %222 = vmatmul.f32.gmra.mxu0 %v111
    %v223 = vpop.f32.mrf.mxu0
    %v224 = vadd.f32 %v68, %v223
    %225 = vmatmul.f32.gmra.mxu0 %v114
    %v226 = vpop.f32.mrf.mxu0
    %v227 = vadd.f32 %v68, %v226
    %228 = vmatmul.f32.gmra.mxu0 %v117
    %v229 = vpop.f32.mrf.mxu0
    %v230 = vadd.f32 %v68, %v229
    %231 = vmatmul.f32.gmra.mxu0 %v120
    %v232 = vpop.f32.mrf.mxu0
    %v233 = vadd.f32 %v68, %v232
    %234 = vmatmul.f32.gmra.mxu0 %v123
    %v235 = vpop.f32.mrf.mxu0
    %v236 = vadd.f32 %v68, %v235
    %237 = vmatmul.f32.gmra.mxu0 %v126
    %v238 = vpop.f32.mrf.mxu0
    %v239 = vadd.f32 %v68, %v238
    %240 = vmatmul.f32.gmra.mxu0 %v129
    %v241 = vpop.f32.mrf.mxu0
    %v242 = vadd.f32 %v68, %v241
    %243 = vmatmul.f32.gmra.mxu0 %v132
    %v244 = vpop.f32.mrf.mxu0
    %v245 = vadd.f32 %v68, %v244
    %246 = vmatmul.f32.gmra.mxu0 %v135
    %v247 = vpop.f32.mrf.mxu0
    %v248 = vadd.f32 %v68, %v247
    %249 = vmatmul.f32.gmra.mxu0 %v138
    %v250 = vpop.f32.mrf.mxu0
    %v251 = vadd.f32 %v68, %v250
    %252 = vmatmul.f32.gmra.mxu0 %v141
    %v253 = vpop.f32.mrf.mxu0
    %v254 = vadd.f32 %v68, %v253
    %255 = vmatmul.f32.gmra.mxu0 %v144
    %v256 = vpop.f32.mrf.mxu0
    %v257 = vadd.f32 %v68, %v256
    %258 = vmatmul.f32.gmra.mxu0 %v147
    %v259 = vpop.f32.mrf.mxu0
    %v260 = vadd.f32 %v68, %v259
    %261 = vmatmul.f32.gmra.mxu0 %v150
    %v262 = vpop.f32.mrf.mxu0
    %v263 = vadd.f32 %v68, %v262
    %264 = vmatmul.f32.gmra.mxu0 %v153
    %v265 = vpop.f32.mrf.mxu0
    %v266 = vadd.f32 %v68, %v265
    %267 = vmatmul.f32.gmra.mxu0 %v156
    %v268 = vpop.f32.mrf.mxu0
    %v269 = vadd.f32 %v68, %v268
    %270 = vmatmul.f32.gmra.mxu0 %v159
    %v271 = vpop.f32.mrf.mxu0
    %v272 = vadd.f32 %v68, %v271
    %273 = vmatmul.f32.gmra.mxu0 %v162
    %v274 = vpop.f32.mrf.mxu0
    %v275 = vadd.f32 %v68, %v274
    %276 = vmatmul.f32.gmra.mxu0 %v165
    %v277 = vpop.f32.mrf.mxu0
    %v278 = vadd.f32 %v68, %v277
    %279 = vdwg.mxu0
    %v280 = vmax.f32 %v185, 0.0
    %v281 = vmax.f32 %v188, 0.0
    %v282 = vmax.f32 %v191, 0.0
    %v283 = vmax.f32 %v194, 0.0
    %v284 = vmax.f32 %v197, 0.0
    %v285 = vmax.f32 %v200, 0.0
    %v286 = vmax.f32 %v203, 0.0
    %v287 = vmax.f32 %v206, 0.0
    %v288 = vmax.f32 %v209, 0.0
    %v289 = vmax.f32 %v212, 0.0
    %v290 = vmax.f32 %v215, 0.0
    %v291 = vmax.f32 %v218, 0.0
    %v292 = vmax.f32 %v221, 0.0
    %v293 = vmax.f32 %v224, 0.0
    %v294 = vmax.f32 %v227, 0.0
    %v295 = vmax.f32 %v230, 0.0
    %v296 = vmax.f32 %v233, 0.0
    %v297 = vmax.f32 %v236, 0.0
    %v298 = vmax.f32 %v239, 0.0
    %v299 = vmax.f32 %v242, 0.0
    %v300 = vmax.f32 %v245, 0.0
    %v301 = vmax.f32 %v248, 0.0
    %v302 = vmax.f32 %v251, 0.0
    %v303 = vmax.f32 %v254, 0.0
    %v304 = vmax.f32 %v257, 0.0
    %v305 = vmax.f32 %v260, 0.0
    %v306 = vmax.f32 %v263, 0.0
    %v307 = vmax.f32 %v266, 0.0
    %v308 = vmax.f32 %v269, 0.0
    %v309 = vmax.f32 %v272, 0.0
    %v310 = vmax.f32 %v275, 0.0
    %v311 = vmax.f32 %v278, 0.0
    %312 = vst [vmem:[#allocation2] sm:$0xff] %v280
    %313 = vst [vmem:[#allocation2 + $0x8] sm:$0xff] %v281
    %314 = vst [vmem:[#allocation2 + $0x10] sm:$0xff] %v282
    %315 = vst [vmem:[#allocation2 + $0x18] sm:$0xff] %v283
    %316 = vst [vmem:[#allocation2 + $0x20] sm:$0xff] %v284
    %317 = vst [vmem:[#allocation2 + $0x28] sm:$0xff] %v285
    %318 = vst [vmem:[#allocation2 + $0x30] sm:$0xff] %v286
    %319 = vst [vmem:[#allocation2 + $0x38] sm:$0xff] %v287
    %320 = vst [vmem:[#allocation2 + $0x40] sm:$0xff] %v288
    %321 = vst [vmem:[#allocation2 + $0x48] sm:$0xff] %v289
    %322 = vst [vmem:[#allocation2 + $0x50] sm:$0xff] %v290
    %323 = vst [vmem:[#allocation2 + $0x58] sm:$0xff] %v291
    %324 = vst [vmem:[#allocation2 + $0x60] sm:$0xff] %v292
    %325 = vst [vmem:[#allocation2 + $0x68] sm:$0xff] %v293
    %326 = vst [vmem:[#allocation2 + $0x70] sm:$0xff] %v294
    %327 = vst [vmem:[#allocation2 + $0x78] sm:$0xff] %v295
    %328 = vst [vmem:[#allocation2 + $0x80] sm:$0xff] %v296
    %329 = vst [vmem:[#allocation2 + $0x88] sm:$0xff] %v297
    %330 = vst [vmem:[#allocation2 + $0x90] sm:$0xff] %v298
    %331 = vst [vmem:[#allocation2 + $0x98] sm:$0xff] %v299
    %332 = vst [vmem:[#allocation2 + $0xa0] sm:$0xff] %v300
    %333 = vst [vmem:[#allocation2 + $0xa8] sm:$0xff] %v301
    %334 = vst [vmem:[#allocation2 + $0xb0] sm:$0xff] %v302
    %335 = vst [vmem:[#allocation2 + $0xb8] sm:$0xff] %v303
    %336 = vst [vmem:[#allocation2 + $0xc0] sm:$0xff] %v304
    %337 = vst [vmem:[#allocation2 + $0xc8] sm:$0xff] %v305
    %338 = vst [vmem:[#allocation2 + $0xd0] sm:$0xff] %v306
    %339 = vst [vmem:[#allocation2 + $0xd8] sm:$0xff] %v307
    %340 = vst [vmem:[#allocation2 + $0xe0] sm:$0xff] %v308
    %341 = vst [vmem:[#allocation2 + $0xe8] sm:$0xff] %v309
    %342 = vst [vmem:[#allocation2 + $0xf0] sm:$0xff] %v310
    %343 = vst [vmem:[#allocation2 + $0xf8] sm:$0xff] %v311
    %v344 = vld [vmem:[%s3] sm:$0xff]
    %v345 = vld [vmem:[%s3 + $0x8] sm:$0xff]
    %v346 = vld [vmem:[%s3 + $0x10] sm:$0xff]
    %v347 = vld [vmem:[%s3 + $0x18] sm:$0xff]
    %v348 = vld [vmem:[%s3 + $0x20] sm:$0xff]
    %v349 = vld [vmem:[%s3 + $0x28] sm:$0xff]
    %v350 = vld [vmem:[%s3 + $0x30] sm:$0xff]
    %v351 = vld [vmem:[%s3 + $0x38] sm:$0xff]
    %v352 = vld [vmem:[%s3 + $0x40] sm:$0xff]
    %v353 = vld [vmem:[%s3 + $0x48] sm:$0xff]
    %v354 = vld [vmem:[%s3 + $0x50] sm:$0xff]
    %v355 = vld [vmem:[%s3 + $0x58] sm:$0xff]
    %v356 = vld [vmem:[%s3 + $0x60] sm:$0xff]
    %v357 = vld [vmem:[%s3 + $0x68] sm:$0xff]
    %v358 = vld [vmem:[%s3 + $0x70] sm:$0xff]
    %v359 = vld [vmem:[%s3 + $0x78] sm:$0xff]
    %v360 = vld [vmem:[%s4] sm:$0x1]
    %v362 = vperm.slane %v360, 0
    %364 = vmatpush.msra.mxu0 %v359
    %365 = vmatpush.msra.mxu0 %v358
    %366 = vmatpush.msra.mxu0 %v357
    %367 = vmatpush.msra.mxu0 %v356
    %368 = vmatpush.msra.mxu0 %v355
    %369 = vmatpush.msra.mxu0 %v354
    %370 = vmatpush.msra.mxu0 %v353
    %371 = vmatpush.msra.mxu0 %v352
    %372 = vmatpush.msra.mxu0 %v351
    %373 = vmatpush.msra.mxu0 %v350
    %374 = vmatpush.msra.mxu0 %v349
    %375 = vmatpush.msra.mxu0 %v348
    %376 = vmatpush.msra.mxu0 %v347
    %377 = vmatpush.msra.mxu0 %v346
    %378 = vmatpush.msra.mxu0 %v345
    %379 = vmatpush.msra.mxu0 %v344
    %380 = vmatmul.f32.gmra.mxu0 %v280
    %v381 = vpop.f32.mrf.mxu0
    %v382 = vadd.f32 %v362, %v381
    %383 = vmatmul.f32.gmra.mxu0 %v281
    %v384 = vpop.f32.mrf.mxu0
    %v385 = vadd.f32 %v362, %v384
    %386 = vmatmul.f32.gmra.mxu0 %v282
    %v387 = vpop.f32.mrf.mxu0
    %v388 = vadd.f32 %v362, %v387
    %389 = vmatmul.f32.gmra.mxu0 %v283
    %v390 = vpop.f32.mrf.mxu0
    %v391 = vadd.f32 %v362, %v390
    %392 = vmatmul.f32.gmra.mxu0 %v284
    %v393 = vpop.f32.mrf.mxu0
    %v394 = vadd.f32 %v362, %v393
    %395 = vmatmul.f32.gmra.mxu0 %v285
    %v396 = vpop.f32.mrf.mxu0
    %v397 = vadd.f32 %v362, %v396
    %398 = vmatmul.f32.gmra.mxu0 %v286
    %v399 = vpop.f32.mrf.mxu0
    %v400 = vadd.f32 %v362, %v399
    %401 = vmatmul.f32.gmra.mxu0 %v287
    %v402 = vpop.f32.mrf.mxu0
    %v403 = vadd.f32 %v362, %v402
    %404 = vmatmul.f32.gmra.mxu0 %v288
    %v405 = vpop.f32.mrf.mxu0
    %v406 = vadd.f32 %v362, %v405
    %407 = vmatmul.f32.gmra.mxu0 %v289
    %v408 = vpop.f32.mrf.mxu0
    %v409 = vadd.f32 %v362, %v408
    %410 = vmatmul.f32.gmra.mxu0 %v290
    %v411 = vpop.f32.mrf.mxu0
    %v412 = vadd.f32 %v362, %v411
    %413 = vmatmul.f32.gmra.mxu0 %v291
    %v414 = vpop.f32.mrf.mxu0
    %v415 = vadd.f32 %v362, %v414
    %416 = vmatmul.f32.gmra.mxu0 %v292
    %v417 = vpop.f32.mrf.mxu0
    %v418 = vadd.f32 %v362, %v417
    %419 = vmatmul.f32.gmra.mxu0 %v293
    %v420 = vpop.f32.mrf.mxu0
    %v421 = vadd.f32 %v362, %v420
    %422 = vmatmul.f32.gmra.mxu0 %v294
    %v423 = vpop.f32.mrf.mxu0
    %v424 = vadd.f32 %v362, %v423
    %425 = vmatmul.f32.gmra.mxu0 %v295
    %v426 = vpop.f32.mrf.mxu0
    %v427 = vadd.f32 %v362, %v426
    %428 = vmatmul.f32.gmra.mxu0 %v296
    %v429 = vpop.f32.mrf.mxu0
    %v430 = vadd.f32 %v362, %v429
    %431 = vmatmul.f32.gmra.mxu0 %v297
    %v432 = vpop.f32.mrf.mxu0
    %v433 = vadd.f32 %v362, %v432
    %434 = vmatmul.f32.gmra.mxu0 %v298
    %v435 = vpop.f32.mrf.mxu0
    %v436 = vadd.f32 %v362, %v435
    %437 = vmatmul.f32.gmra.mxu0 %v299
    %v438 = vpop.f32.mrf.mxu0
    %v439 = vadd.f32 %v362, %v438
    %440 = vmatmul.f32.gmra.mxu0 %v300
    %v441 = vpop.f32.mrf.mxu0
    %v442 = vadd.f32 %v362, %v441
    %443 = vmatmul.f32.gmra.mxu0 %v301
    %v444 = vpop.f32.mrf.mxu0
    %v445 = vadd.f32 %v362, %v444
    %446 = vmatmul.f32.gmra.mxu0 %v302
    %v447 = vpop.f32.mrf.mxu0
    %v448 = vadd.f32 %v362, %v447
    %449 = vmatmul.f32.gmra.mxu0 %v303
    %v450 = vpop.f32.mrf.mxu0
    %v451 = vadd.f32 %v362, %v450
    %452 = vmatmul.f32.gmra.mxu0 %v304
    %v453 = vpop.f32.mrf.mxu0
    %v454 = vadd.f32 %v362, %v453
    %455 = vmatmul.f32.gmra.mxu0 %v305
    %v456 = vpop.f32.mrf.mxu0
    %v457 = vadd.f32 %v362, %v456
    %458 = vmatmul.f32.gmra.mxu0 %v306
    %v459 = vpop.f32.mrf.mxu0
    %v460 = vadd.f32 %v362, %v459
    %461 = vmatmul.f32.gmra.mxu0 %v307
    %v462 = vpop.f32.mrf.mxu0
    %v463 = vadd.f32 %v362, %v462
    %464 = vmatmul.f32.gmra.mxu0 %v308
    %v465 = vpop.f32.mrf.mxu0
    %v466 = vadd.f32 %v362, %v465
    %467 = vmatmul.f32.gmra.mxu0 %v309
    %v468 = vpop.f32.mrf.mxu0
    %v469 = vadd.f32 %v362, %v468
    %470 = vmatmul.f32.gmra.mxu0 %v310
    %v471 = vpop.f32.mrf.mxu0
    %v472 = vadd.f32 %v362, %v471
    %473 = vmatmul.f32.gmra.mxu0 %v311
    %v474 = vpop.f32.mrf.mxu0
    %v475 = vadd.f32 %v362, %v474
    %476 = vdwg.mxu0
    %v477 = vmax.f32 %v382, 0.0
    %v478 = vmax.f32 %v385, 0.0
    %v479 = vmax.f32 %v388, 0.0
    %v480 = vmax.f32 %v391, 0.0
    %v481 = vmax.f32 %v394, 0.0
    %v482 = vmax.f32 %v397, 0.0
    %v483 = vmax.f32 %v400, 0.0
    %v484 = vmax.f32 %v403, 0.0
    %v485 = vmax.f32 %v406, 0.0
    %v486 = vmax.f32 %v409, 0.0
    %v487 = vmax.f32 %v412, 0.0
    %v488 = vmax.f32 %v415, 0.0
    %v489 = vmax.f32 %v418, 0.0
    %v490 = vmax.f32 %v421, 0.0
    %v491 = vmax.f32 %v424, 0.0
    %v492 = vmax.f32 %v427, 0.0
    %v493 = vmax.f32 %v430, 0.0
    %v494 = vmax.f32 %v433, 0.0
    %v495 = vmax.f32 %v436, 0.0
    %v496 = vmax.f32 %v439, 0.0
    %v497 = vmax.f32 %v442, 0.0
    %v498 = vmax.f32 %v445, 0.0
    %v499 = vmax.f32 %v448, 0.0
    %v500 = vmax.f32 %v451, 0.0
    %v501 = vmax.f32 %v454, 0.0
    %v502 = vmax.f32 %v457, 0.0
    %v503 = vmax.f32 %v460, 0.0
    %v504 = vmax.f32 %v463, 0.0
    %v505 = vmax.f32 %v466, 0.0
    %v506 = vmax.f32 %v469, 0.0
    %v507 = vmax.f32 %v472, 0.0
    %v508 = vmax.f32 %v475, 0.0
    %vm509 = vcmask 523264
    %510 = vst.msk [vmem:[%s8] sm:$0xff] %vm509, %v477
    %511 = vst.msk [vmem:[%s8 + $0x8] sm:$0xff] %vm509, %v478
    %512 = vst.msk [vmem:[%s8 + $0x10] sm:$0xff] %vm509, %v479
    %513 = vst.msk [vmem:[%s8 + $0x18] sm:$0xff] %vm509, %v480
    %514 = vst.msk [vmem:[%s8 + $0x20] sm:$0xff] %vm509, %v481
    %515 = vst.msk [vmem:[%s8 + $0x28] sm:$0xff] %vm509, %v482
    %516 = vst.msk [vmem:[%s8 + $0x30] sm:$0xff] %vm509, %v483
    %517 = vst.msk [vmem:[%s8 + $0x38] sm:$0xff] %vm509, %v484
    %518 = vst.msk [vmem:[%s8 + $0x40] sm:$0xff] %vm509, %v485
    %519 = vst.msk [vmem:[%s8 + $0x48] sm:$0xff] %vm509, %v486
    %520 = vst.msk [vmem:[%s8 + $0x50] sm:$0xff] %vm509, %v487
    %521 = vst.msk [vmem:[%s8 + $0x58] sm:$0xff] %vm509, %v488
    %522 = vst.msk [vmem:[%s8 + $0x60] sm:$0xff] %vm509, %v489
    %523 = vst.msk [vmem:[%s8 + $0x68] sm:$0xff] %vm509, %v490
    %524 = vst.msk [vmem:[%s8 + $0x70] sm:$0xff] %vm509, %v491
    %525 = vst.msk [vmem:[%s8 + $0x78] sm:$0xff] %vm509, %v492
    %526 = vst.msk [vmem:[%s8 + $0x80] sm:$0xff] %vm509, %v493
    %527 = vst.msk [vmem:[%s8 + $0x88] sm:$0xff] %vm509, %v494
    %528 = vst.msk [vmem:[%s8 + $0x90] sm:$0xff] %vm509, %v495
    %529 = vst.msk [vmem:[%s8 + $0x98] sm:$0xff] %vm509, %v496
    %530 = vst.msk [vmem:[%s8 + $0xa0] sm:$0xff] %vm509, %v497
    %531 = vst.msk [vmem:[%s8 + $0xa8] sm:$0xff] %vm509, %v498
    %532 = vst.msk [vmem:[%s8 + $0xb0] sm:$0xff] %vm509, %v499
    %533 = vst.msk [vmem:[%s8 + $0xb8] sm:$0xff] %vm509, %v500
    %534 = vst.msk [vmem:[%s8 + $0xc0] sm:$0xff] %vm509, %v501
    %535 = vst.msk [vmem:[%s8 + $0xc8] sm:$0xff] %vm509, %v502
    %536 = vst.msk [vmem:[%s8 + $0xd0] sm:$0xff] %vm509, %v503
    %537 = vst.msk [vmem:[%s8 + $0xd8] sm:$0xff] %vm509, %v504
    %538 = vst.msk [vmem:[%s8 + $0xe0] sm:$0xff] %vm509, %v505
    %539 = vst.msk [vmem:[%s8 + $0xe8] sm:$0xff] %vm509, %v506
    %540 = vst.msk [vmem:[%s8 + $0xf0] sm:$0xff] %vm509, %v507
    %541 = vst.msk [vmem:[%s8 + $0xf8] sm:$0xff] %vm509, %v508
    %v542 = vld [vmem:[%s5] sm:$0xff]
    %v543 = vld [vmem:[%s5 + $0x8] sm:$0xff]
    %v544 = vld [vmem:[%s5 + $0x10] sm:$0xff]
    %v545 = vld [vmem:[%s5 + $0x18] sm:$0xff]
    %v546 = vld [vmem:[%s5 + $0x20] sm:$0xff]
    %v547 = vld [vmem:[%s5 + $0x28] sm:$0xff]
    %v548 = vld [vmem:[%s5 + $0x30] sm:$0xff]
    %v549 = vld [vmem:[%s5 + $0x38] sm:$0xff]
    %v550 = vld [vmem:[%s6] sm:$0x1]
    %v552 = vperm.slane %v550, 0
    %v555 = vsel %vm509, %v477, 0
    %v558 = vsel %vm509, %v478, 0
    %v561 = vsel %vm509, %v479, 0
    %v564 = vsel %vm509, %v480, 0
    %v567 = vsel %vm509, %v481, 0
    %v570 = vsel %vm509, %v482, 0
    %v573 = vsel %vm509, %v483, 0
    %v576 = vsel %vm509, %v484, 0
    %v579 = vsel %vm509, %v485, 0
    %v582 = vsel %vm509, %v486, 0
    %v585 = vsel %vm509, %v487, 0
    %v588 = vsel %vm509, %v488, 0
    %v591 = vsel %vm509, %v489, 0
    %v594 = vsel %vm509, %v490, 0
    %v597 = vsel %vm509, %v491, 0
    %v600 = vsel %vm509, %v492, 0
    %v603 = vsel %vm509, %v493, 0
    %v606 = vsel %vm509, %v494, 0
    %v609 = vsel %vm509, %v495, 0
    %v612 = vsel %vm509, %v496, 0
    %v615 = vsel %vm509, %v497, 0
    %v618 = vsel %vm509, %v498, 0
    %v621 = vsel %vm509, %v499, 0
    %v624 = vsel %vm509, %v500, 0
    %v627 = vsel %vm509, %v501, 0
    %v630 = vsel %vm509, %v502, 0
    %v633 = vsel %vm509, %v503, 0
    %v636 = vsel %vm509, %v504, 0
    %v639 = vsel %vm509, %v505, 0
    %v642 = vsel %vm509, %v506, 0
    %v645 = vsel %vm509, %v507, 0
    %v648 = vsel %vm509, %v508, 0
    %650 = vmatpush.msra.mxu0 0.0
    %651 = vmatpush.msra.mxu0 0.0
    %652 = vmatpush.msra.mxu0 0.0
    %653 = vmatpush.msra.mxu0 0.0
    %654 = vmatpush.msra.mxu0 0.0
    %655 = vmatpush.msra.mxu0 0.0
    %656 = vmatpush.msra.mxu0 0.0
    %657 = vmatpush.msra.mxu0 0.0
    %658 = vmatpush.msra.mxu0 %v549
    %659 = vmatpush.msra.mxu0 %v548
    %660 = vmatpush.msra.mxu0 %v547
    %661 = vmatpush.msra.mxu0 %v546
    %662 = vmatpush.msra.mxu0 %v545
    %663 = vmatpush.msra.mxu0 %v544
    %664 = vmatpush.msra.mxu0 %v543
    %665 = vmatpush.msra.mxu0 %v542
    %666 = vmatmul.f32.gmra.mxu0 %v555
    %v667 = vpop.f32.mrf.mxu0
    %v668 = vadd.f32 %v552, %v667
    %669 = vmatmul.f32.gmra.mxu0 %v558
    %v670 = vpop.f32.mrf.mxu0
    %v671 = vadd.f32 %v552, %v670
    %672 = vmatmul.f32.gmra.mxu0 %v561
    %v673 = vpop.f32.mrf.mxu0
    %v674 = vadd.f32 %v552, %v673
    %675 = vmatmul.f32.gmra.mxu0 %v564
    %v676 = vpop.f32.mrf.mxu0
    %v677 = vadd.f32 %v552, %v676
    %678 = vmatmul.f32.gmra.mxu0 %v567
    %v679 = vpop.f32.mrf.mxu0
    %v680 = vadd.f32 %v552, %v679
    %681 = vmatmul.f32.gmra.mxu0 %v570
    %v682 = vpop.f32.mrf.mxu0
    %v683 = vadd.f32 %v552, %v682
    %684 = vmatmul.f32.gmra.mxu0 %v573
    %v685 = vpop.f32.mrf.mxu0
    %v686 = vadd.f32 %v552, %v685
    %687 = vmatmul.f32.gmra.mxu0 %v576
    %v688 = vpop.f32.mrf.mxu0
    %v689 = vadd.f32 %v552, %v688
    %690 = vmatmul.f32.gmra.mxu0 %v579
    %v691 = vpop.f32.mrf.mxu0
    %v692 = vadd.f32 %v552, %v691
    %693 = vmatmul.f32.gmra.mxu0 %v582
    %v694 = vpop.f32.mrf.mxu0
    %v695 = vadd.f32 %v552, %v694
    %696 = vmatmul.f32.gmra.mxu0 %v585
    %v697 = vpop.f32.mrf.mxu0
    %v698 = vadd.f32 %v552, %v697
    %699 = vmatmul.f32.gmra.mxu0 %v588
    %v700 = vpop.f32.mrf.mxu0
    %v701 = vadd.f32 %v552, %v700
    %702 = vmatmul.f32.gmra.mxu0 %v591
    %v703 = vpop.f32.mrf.mxu0
    %v704 = vadd.f32 %v552, %v703
    %705 = vmatmul.f32.gmra.mxu0 %v594
    %v706 = vpop.f32.mrf.mxu0
    %v707 = vadd.f32 %v552, %v706
    %708 = vmatmul.f32.gmra.mxu0 %v597
    %v709 = vpop.f32.mrf.mxu0
    %v710 = vadd.f32 %v552, %v709
    %711 = vmatmul.f32.gmra.mxu0 %v600
    %v712 = vpop.f32.mrf.mxu0
    %v713 = vadd.f32 %v552, %v712
    %714 = vmatmul.f32.gmra.mxu0 %v603
    %v715 = vpop.f32.mrf.mxu0
    %v716 = vadd.f32 %v552, %v715
    %717 = vmatmul.f32.gmra.mxu0 %v606
    %v718 = vpop.f32.mrf.mxu0
    %v719 = vadd.f32 %v552, %v718
    %720 = vmatmul.f32.gmra.mxu0 %v609
    %v721 = vpop.f32.mrf.mxu0
    %v722 = vadd.f32 %v552, %v721
    %723 = vmatmul.f32.gmra.mxu0 %v612
    %v724 = vpop.f32.mrf.mxu0
    %v725 = vadd.f32 %v552, %v724
    %726 = vmatmul.f32.gmra.mxu0 %v615
    %v727 = vpop.f32.mrf.mxu0
    %v728 = vadd.f32 %v552, %v727
    %729 = vmatmul.f32.gmra.mxu0 %v618
    %v730 = vpop.f32.mrf.mxu0
    %v731 = vadd.f32 %v552, %v730
    %732 = vmatmul.f32.gmra.mxu0 %v621
    %v733 = vpop.f32.mrf.mxu0
    %v734 = vadd.f32 %v552, %v733
    %735 = vmatmul.f32.gmra.mxu0 %v624
    %v736 = vpop.f32.mrf.mxu0
    %v737 = vadd.f32 %v552, %v736
    %738 = vmatmul.f32.gmra.mxu0 %v627
    %v739 = vpop.f32.mrf.mxu0
    %v740 = vadd.f32 %v552, %v739
    %741 = vmatmul.f32.gmra.mxu0 %v630
    %v742 = vpop.f32.mrf.mxu0
    %v743 = vadd.f32 %v552, %v742
    %744 = vmatmul.f32.gmra.mxu0 %v633
    %v745 = vpop.f32.mrf.mxu0
    %v746 = vadd.f32 %v552, %v745
    %747 = vmatmul.f32.gmra.mxu0 %v636
    %v748 = vpop.f32.mrf.mxu0
    %v749 = vadd.f32 %v552, %v748
    %750 = vmatmul.f32.gmra.mxu0 %v639
    %v751 = vpop.f32.mrf.mxu0
    %v752 = vadd.f32 %v552, %v751
    %753 = vmatmul.f32.gmra.mxu0 %v642
    %v754 = vpop.f32.mrf.mxu0
    %v755 = vadd.f32 %v552, %v754
    %756 = vmatmul.f32.gmra.mxu0 %v645
    %v757 = vpop.f32.mrf.mxu0
    %v758 = vadd.f32 %v552, %v757
    %759 = vmatmul.f32.gmra.mxu0 %v648
    %v760 = vpop.f32.mrf.mxu0
    %v761 = vadd.f32 %v552, %v760
    %762 = vdwg.mxu0
    %vm763 = vcmask 130048
    %v764 = vsel %vm763, %v668, -inf
    %765 = vmax.xlane.f32.xlu0 %v764
    %v766 = vpop.xlane.xlu0 %765
    %v767 = vsel %vm763, %v671, -inf
    %768 = vmax.xlane.f32.xlu0 %v767
    %v769 = vpop.xlane.xlu0 %768
    %v770 = vsel %vm763, %v674, -inf
    %771 = vmax.xlane.f32.xlu0 %v770
    %v772 = vpop.xlane.xlu0 %771
    %v773 = vsel %vm763, %v677, -inf
    %774 = vmax.xlane.f32.xlu0 %v773
    %v775 = vpop.xlane.xlu0 %774
    %v776 = vsel %vm763, %v680, -inf
    %777 = vmax.xlane.f32.xlu0 %v776
    %v778 = vpop.xlane.xlu0 %777
    %v779 = vsel %vm763, %v683, -inf
    %780 = vmax.xlane.f32.xlu0 %v779
    %v781 = vpop.xlane.xlu0 %780
    %v782 = vsel %vm763, %v686, -inf
    %783 = vmax.xlane.f32.xlu0 %v782
    %v784 = vpop.xlane.xlu0 %783
    %v785 = vsel %vm763, %v689, -inf
    %786 = vmax.xlane.f32.xlu0 %v785
    %v787 = vpop.xlane.xlu0 %786
    %v788 = vsel %vm763, %v692, -inf
    %789 = vmax.xlane.f32.xlu0 %v788
    %v790 = vpop.xlane.xlu0 %789
    %v791 = vsel %vm763, %v695, -inf
    %792 = vmax.xlane.f32.xlu0 %v791
    %v793 = vpop.xlane.xlu0 %792
    %v794 = vsel %vm763, %v698, -inf
    %795 = vmax.xlane.f32.xlu0 %v794
    %v796 = vpop.xlane.xlu0 %795
    %v797 = vsel %vm763, %v701, -inf
    %798 = vmax.xlane.f32.xlu0 %v797
    %v799 = vpop.xlane.xlu0 %798
    %v800 = vsel %vm763, %v704, -inf
    %801 = vmax.xlane.f32.xlu0 %v800
    %v802 = vpop.xlane.xlu0 %801
    %v803 = vsel %vm763, %v707, -inf
    %804 = vmax.xlane.f32.xlu0 %v803
    %v805 = vpop.xlane.xlu0 %804
    %v806 = vsel %vm763, %v710, -inf
    %807 = vmax.xlane.f32.xlu0 %v806
    %v808 = vpop.xlane.xlu0 %807
    %v809 = vsel %vm763, %v713, -inf
    %810 = vmax.xlane.f32.xlu0 %v809
    %v811 = vpop.xlane.xlu0 %810
    %v812 = vsel %vm763, %v716, -inf
    %813 = vmax.xlane.f32.xlu0 %v812
    %v814 = vpop.xlane.xlu0 %813
    %v815 = vsel %vm763, %v719, -inf
    %816 = vmax.xlane.f32.xlu0 %v815
    %v817 = vpop.xlane.xlu0 %816
    %v818 = vsel %vm763, %v722, -inf
    %819 = vmax.xlane.f32.xlu0 %v818
    %v820 = vpop.xlane.xlu0 %819
    %v821 = vsel %vm763, %v725, -inf
    %822 = vmax.xlane.f32.xlu0 %v821
    %v823 = vpop.xlane.xlu0 %822
    %v824 = vsel %vm763, %v728, -inf
    %825 = vmax.xlane.f32.xlu0 %v824
    %v826 = vpop.xlane.xlu0 %825
    %v827 = vsel %vm763, %v731, -inf
    %828 = vmax.xlane.f32.xlu0 %v827
    %v829 = vpop.xlane.xlu0 %828
    %v830 = vsel %vm763, %v734, -inf
    %831 = vmax.xlane.f32.xlu0 %v830
    %v832 = vpop.xlane.xlu0 %831
    %v833 = vsel %vm763, %v737, -inf
    %834 = vmax.xlane.f32.xlu0 %v833
    %v835 = vpop.xlane.xlu0 %834
    %v836 = vsel %vm763, %v740, -inf
    %837 = vmax.xlane.f32.xlu0 %v836
    %v838 = vpop.xlane.xlu0 %837
    %v839 = vsel %vm763, %v743, -inf
    %840 = vmax.xlane.f32.xlu0 %v839
    %v841 = vpop.xlane.xlu0 %840
    %v842 = vsel %vm763, %v746, -inf
    %843 = vmax.xlane.f32.xlu0 %v842
    %v844 = vpop.xlane.xlu0 %843
    %v845 = vsel %vm763, %v749, -inf
    %846 = vmax.xlane.f32.xlu0 %v845
    %v847 = vpop.xlane.xlu0 %846
    %v848 = vsel %vm763, %v752, -inf
    %849 = vmax.xlane.f32.xlu0 %v848
    %v850 = vpop.xlane.xlu0 %849
    %v851 = vsel %vm763, %v755, -inf
    %852 = vmax.xlane.f32.xlu0 %v851
    %v853 = vpop.xlane.xlu0 %852
    %v854 = vsel %vm763, %v758, -inf
    %855 = vmax.xlane.f32.xlu0 %v854
    %v856 = vpop.xlane.xlu0 %855
    %v857 = vsel %vm763, %v761, -inf
    %858 = vmax.xlane.f32.xlu0 %v857
    %v859 = vpop.xlane.xlu0 %858
    %v860 = vsub.f32 %v668, %v766
    %v861 = vsub.f32 %v671, %v769
    %v862 = vsub.f32 %v674, %v772
    %v863 = vsub.f32 %v677, %v775
    %v864 = vsub.f32 %v680, %v778
    %v865 = vsub.f32 %v683, %v781
    %v866 = vsub.f32 %v686, %v784
    %v867 = vsub.f32 %v689, %v787
    %v868 = vsub.f32 %v692, %v790
    %v869 = vsub.f32 %v695, %v793
    %v870 = vsub.f32 %v698, %v796
    %v871 = vsub.f32 %v701, %v799
    %v872 = vsub.f32 %v704, %v802
    %v873 = vsub.f32 %v707, %v805
    %v874 = vsub.f32 %v710, %v808
    %v875 = vsub.f32 %v713, %v811
    %v876 = vsub.f32 %v716, %v814
    %v877 = vsub.f32 %v719, %v817
    %v878 = vsub.f32 %v722, %v820
    %v879 = vsub.f32 %v725, %v823
    %v880 = vsub.f32 %v728, %v826
    %v881 = vsub.f32 %v731, %v829
    %v882 = vsub.f32 %v734, %v832
    %v883 = vsub.f32 %v737, %v835
    %v884 = vsub.f32 %v740, %v838
    %v885 = vsub.f32 %v743, %v841
    %v886 = vsub.f32 %v746, %v844
    %v887 = vsub.f32 %v749, %v847
    %v888 = vsub.f32 %v752, %v850
    %v889 = vsub.f32 %v755, %v853
    %v890 = vsub.f32 %v758, %v856
    %v891 = vsub.f32 %v761, %v859
    %v892 = vmul.f32 %v860, 1.442695
    %v893 = vpow.pop %v892
    %v894 = vmul.f32 %v861, 1.442695
    %v895 = vpow.pop %v894
    %v896 = vmul.f32 %v862, 1.442695
    %v897 = vpow.pop %v896
    %v898 = vmul.f32 %v863, 1.442695
    %v899 = vpow.pop %v898
    %v900 = vmul.f32 %v864, 1.442695
    %v901 = vpow.pop %v900
    %v902 = vmul.f32 %v865, 1.442695
    %v903 = vpow.pop %v902
    %v904 = vmul.f32 %v866, 1.442695
    %v905 = vpow.pop %v904
    %v906 = vmul.f32 %v867, 1.442695
    %v907 = vpow.pop %v906
    %v908 = vmul.f32 %v868, 1.442695
    %v909 = vpow.pop %v908
    %v910 = vmul.f32 %v869, 1.442695
    %v911 = vpow.pop %v910
    %v912 = vmul.f32 %v870, 1.442695
    %v913 = vpow.pop %v912
    %v914 = vmul.f32 %v871, 1.442695
    %v915 = vpow.pop %v914
    %v916 = vmul.f32 %v872, 1.442695
    %v917 = vpow.pop %v916
    %v918 = vmul.f32 %v873, 1.442695
    %v919 = vpow.pop %v918
    %v920 = vmul.f32 %v874, 1.442695
    %v921 = vpow.pop %v920
    %v922 = vmul.f32 %v875, 1.442695
    %v923 = vpow.pop %v922
    %v924 = vmul.f32 %v876, 1.442695
    %v925 = vpow.pop %v924
    %v926 = vmul.f32 %v877, 1.442695
    %v927 = vpow.pop %v926
    %v928 = vmul.f32 %v878, 1.442695
    %v929 = vpow.pop %v928
    %v930 = vmul.f32 %v879, 1.442695
    %v931 = vpow.pop %v930
    %v932 = vmul.f32 %v880, 1.442695
    %v933 = vpow.pop %v932
    %v934 = vmul.f32 %v881, 1.442695
    %v935 = vpow.pop %v934
    %v936 = vmul.f32 %v882, 1.442695
    %v937 = vpow.pop %v936
    %v938 = vmul.f32 %v883, 1.442695
    %v939 = vpow.pop %v938
    %v940 = vmul.f32 %v884, 1.442695
    %v941 = vpow.pop %v940
    %v942 = vmul.f32 %v885, 1.442695
    %v943 = vpow.pop %v942
    %v944 = vmul.f32 %v886, 1.442695
    %v945 = vpow.pop %v944
    %v946 = vmul.f32 %v887, 1.442695
    %v947 = vpow.pop %v946
    %v948 = vmul.f32 %v888, 1.442695
    %v949 = vpow.pop %v948
    %v950 = vmul.f32 %v889, 1.442695
    %v951 = vpow.pop %v950
    %v952 = vmul.f32 %v890, 1.442695
    %v953 = vpow.pop %v952
    %v954 = vmul.f32 %v891, 1.442695
    %v955 = vpow.pop %v954
    %v956 = vsel %vm763, %v893, 0.0
    %957 = vadd.xlane.f32.xlu0 %v956
    %v958 = vpop.xlane.xlu0 %957
    %v959 = vsel %vm763, %v895, 0.0
    %960 = vadd.xlane.f32.xlu0 %v959
    %v961 = vpop.xlane.xlu0 %960
    %v962 = vsel %vm763, %v897, 0.0
    %963 = vadd.xlane.f32.xlu0 %v962
    %v964 = vpop.xlane.xlu0 %963
    %v965 = vsel %vm763, %v899, 0.0
    %966 = vadd.xlane.f32.xlu0 %v965
    %v967 = vpop.xlane.xlu0 %966
    %v968 = vsel %vm763, %v901, 0.0
    %969 = vadd.xlane.f32.xlu0 %v968
    %v970 = vpop.xlane.xlu0 %969
    %v971 = vsel %vm763, %v903, 0.0
    %972 = vadd.xlane.f32.xlu0 %v971
    %v973 = vpop.xlane.xlu0 %972
    %v974 = vsel %vm763, %v905, 0.0
    %975 = vadd.xlane.f32.xlu0 %v974
    %v976 = vpop.xlane.xlu0 %975
    %v977 = vsel %vm763, %v907, 0.0
    %978 = vadd.xlane.f32.xlu0 %v977
    %v979 = vpop.xlane.xlu0 %978
    %v980 = vsel %vm763, %v909, 0.0
    %981 = vadd.xlane.f32.xlu0 %v980
    %v982 = vpop.xlane.xlu0 %981
    %v983 = vsel %vm763, %v911, 0.0
    %984 = vadd.xlane.f32.xlu0 %v983
    %v985 = vpop.xlane.xlu0 %984
    %v986 = vsel %vm763, %v913, 0.0
    %987 = vadd.xlane.f32.xlu0 %v986
    %v988 = vpop.xlane.xlu0 %987
    %v989 = vsel %vm763, %v915, 0.0
    %990 = vadd.xlane.f32.xlu0 %v989
    %v991 = vpop.xlane.xlu0 %990
    %v992 = vsel %vm763, %v917, 0.0
    %993 = vadd.xlane.f32.xlu0 %v992
    %v994 = vpop.xlane.xlu0 %993
    %v995 = vsel %vm763, %v919, 0.0
    %996 = vadd.xlane.f32.xlu0 %v995
    %v997 = vpop.xlane.xlu0 %996
    %v998 = vsel %vm763, %v921, 0.0
    %999 = vadd.xlane.f32.xlu0 %v998
    %v1000 = vpop.xlane.xlu0 %999
    %v1001 = vsel %vm763, %v923, 0.0
    %1002 = vadd.xlane.f32.xlu0 %v1001
    %v1003 = vpop.xlane.xlu0 %1002
    %v1004 = vsel %vm763, %v925, 0.0
    %1005 = vadd.xlane.f32.xlu0 %v1004
    %v1006 = vpop.xlane.xlu0 %1005
    %v1007 = vsel %vm763, %v927, 0.0
    %1008 = vadd.xlane.f32.xlu0 %v1007
    %v1009 = vpop.xlane.xlu0 %1008
    %v1010 = vsel %vm763, %v929, 0.0
    %1011 = vadd.xlane.f32.xlu0 %v1010
    %v1012 = vpop.xlane.xlu0 %1011
    %v1013 = vsel %vm763, %v931, 0.0
    %1014 = vadd.xlane.f32.xlu0 %v1013
    %v1015 = vpop.xlane.xlu0 %1014
    %v1016 = vsel %vm763, %v933, 0.0
    %1017 = vadd.xlane.f32.xlu0 %v1016
    %v1018 = vpop.xlane.xlu0 %1017
    %v1019 = vsel %vm763, %v935, 0.0
    %1020 = vadd.xlane.f32.xlu0 %v1019
    %v1021 = vpop.xlane.xlu0 %1020
    %v1022 = vsel %vm763, %v937, 0.0
    %1023 = vadd.xlane.f32.xlu0 %v1022
    %v1024 = vpop.xlane.xlu0 %1023
    %v1025 = vsel %vm763, %v939, 0.0
    %1026 = vadd.xlane.f32.xlu0 %v1025
    %v1027 = vpop.xlane.xlu0 %1026
    %v1028 = vsel %vm763, %v941, 0.0
    %1029 = vadd.xlane.f32.xlu0 %v1028
    %v1030 = vpop.xlane.xlu0 %1029
    %v1031 = vsel %vm763, %v943, 0.0
    %1032 = vadd.xlane.f32.xlu0 %v1031
    %v1033 = vpop.xlane.xlu0 %1032
    %v1034 = vsel %vm763, %v945, 0.0
    %1035 = vadd.xlane.f32.xlu0 %v1034
    %v1036 = vpop.xlane.xlu0 %1035
    %v1037 = vsel %vm763, %v947, 0.0
    %1038 = vadd.xlane.f32.xlu0 %v1037
    %v1039 = vpop.xlane.xlu0 %1038
    %v1040 = vsel %vm763, %v949, 0.0
    %1041 = vadd.xlane.f32.xlu0 %v1040
    %v1042 = vpop.xlane.xlu0 %1041
    %v1043 = vsel %vm763, %v951, 0.0
    %1044 = vadd.xlane.f32.xlu0 %v1043
    %v1045 = vpop.xlane.xlu0 %1044
    %v1046 = vsel %vm763, %v953, 0.0
    %1047 = vadd.xlane.f32.xlu0 %v1046
    %v1048 = vpop.xlane.xlu0 %1047
    %v1049 = vsel %vm763, %v955, 0.0
    %1050 = vadd.xlane.f32.xlu0 %v1049
    %v1051 = vpop.xlane.xlu0 %1050
    %v1052 = vrcp.pop %v958
    %v1053 = vrcp.pop %v961
    %v1054 = vrcp.pop %v964
    %v1055 = vrcp.pop %v967
    %v1056 = vrcp.pop %v970
    %v1057 = vrcp.pop %v973
    %v1058 = vrcp.pop %v976
    %v1059 = vrcp.pop %v979
    %v1060 = vrcp.pop %v982
    %v1061 = vrcp.pop %v985
    %v1062 = vrcp.pop %v988
    %v1063 = vrcp.pop %v991
    %v1064 = vrcp.pop %v994
    %v1065 = vrcp.pop %v997
    %v1066 = vrcp.pop %v1000
    %v1067 = vrcp.pop %v1003
    %v1068 = vrcp.pop %v1006
    %v1069 = vrcp.pop %v1009
    %v1070 = vrcp.pop %v1012
    %v1071 = vrcp.pop %v1015
    %v1072 = vrcp.pop %v1018
    %v1073 = vrcp.pop %v1021
    %v1074 = vrcp.pop %v1024
    %v1075 = vrcp.pop %v1027
    %v1076 = vrcp.pop %v1030
    %v1077 = vrcp.pop %v1033
    %v1078 = vrcp.pop %v1036
    %v1079 = vrcp.pop %v1039
    %v1080 = vrcp.pop %v1042
    %v1081 = vrcp.pop %v1045
    %v1082 = vrcp.pop %v1048
    %v1083 = vrcp.pop %v1051
    %v1084 = vmul.f32 %v958, %v1052
    %v1085 = vmul.f32 %v961, %v1053
    %v1086 = vmul.f32 %v964, %v1054
    %v1087 = vmul.f32 %v967, %v1055
    %v1088 = vmul.f32 %v970, %v1056
    %v1089 = vmul.f32 %v973, %v1057
    %v1090 = vmul.f32 %v976, %v1058
    %v1091 = vmul.f32 %v979, %v1059
    %v1092 = vmul.f32 %v982, %v1060
    %v1093 = vmul.f32 %v985, %v1061
    %v1094 = vmul.f32 %v988, %v1062
    %v1095 = vmul.f32 %v991, %v1063
    %v1096 = vmul.f32 %v994, %v1064
    %v1097 = vmul.f32 %v997, %v1065
    %v1098 = vmul.f32 %v1000, %v1066
    %v1099 = vmul.f32 %v1003, %v1067
    %v1100 = vmul.f32 %v1006, %v1068
    %v1101 = vmul.f32 %v1009, %v1069
    %v1102 = vmul.f32 %v1012, %v1070
    %v1103 = vmul.f32 %v1015, %v1071
    %v1104 = vmul.f32 %v1018, %v1072
    %v1105 = vmul.f32 %v1021, %v1073
    %v1106 = vmul.f32 %v1024, %v1074
    %v1107 = vmul.f32 %v1027, %v1075
    %v1108 = vmul.f32 %v1030, %v1076
    %v1109 = vmul.f32 %v1033, %v1077
    %v1110 = vmul.f32 %v1036, %v1078
    %v1111 = vmul.f32 %v1039, %v1079
    %v1112 = vmul.f32 %v1042, %v1080
    %v1113 = vmul.f32 %v1045, %v1081
    %v1114 = vmul.f32 %v1048, %v1082
    %v1115 = vmul.f32 %v1051, %v1083
    %v1116 = vsub.f32 2.0, %v1084
    %v1117 = vsub.f32 2.0, %v1085
    %v1118 = vsub.f32 2.0, %v1086
    %v1119 = vsub.f32 2.0, %v1087
    %v1120 = vsub.f32 2.0, %v1088
    %v1121 = vsub.f32 2.0, %v1089
    %v1122 = vsub.f32 2.0, %v1090
    %v1123 = vsub.f32 2.0, %v1091
    %v1124 = vsub.f32 2.0, %v1092
    %v1125 = vsub.f32 2.0, %v1093
    %v1126 = vsub.f32 2.0, %v1094
    %v1127 = vsub.f32 2.0, %v1095
    %v1128 = vsub.f32 2.0, %v1096
    %v1129 = vsub.f32 2.0, %v1097
    %v1130 = vsub.f32 2.0, %v1098
    %v1131 = vsub.f32 2.0, %v1099
    %v1132 = vsub.f32 2.0, %v1100
    %v1133 = vsub.f32 2.0, %v1101
    %v1134 = vsub.f32 2.0, %v1102
    %v1135 = vsub.f32 2.0, %v1103
    %v1136 = vsub.f32 2.0, %v1104
    %v1137 = vsub.f32 2.0, %v1105
    %v1138 = vsub.f32 2.0, %v1106
    %v1139 = vsub.f32 2.0, %v1107
    %v1140 = vsub.f32 2.0, %v1108
    %v1141 = vsub.f32 2.0, %v1109
    %v1142 = vsub.f32 2.0, %v1110
    %v1143 = vsub.f32 2.0, %v1111
    %v1144 = vsub.f32 2.0, %v1112
    %v1145 = vsub.f32 2.0, %v1113
    %v1146 = vsub.f32 2.0, %v1114
    %v1147 = vsub.f32 2.0, %v1115
    %v1148 = vmul.f32 %v1052, %v1116
    %v1149 = vmul.f32 %v1053, %v1117
    %v1150 = vmul.f32 %v1054, %v1118
    %v1151 = vmul.f32 %v1055, %v1119
    %v1152 = vmul.f32 %v1056, %v1120
    %v1153 = vmul.f32 %v1057, %v1121
    %v1154 = vmul.f32 %v1058, %v1122
    %v1155 = vmul.f32 %v1059, %v1123
    %v1156 = vmul.f32 %v1060, %v1124
    %v1157 = vmul.f32 %v1061, %v1125
    %v1158 = vmul.f32 %v1062, %v1126
    %v1159 = vmul.f32 %v1063, %v1127
    %v1160 = vmul.f32 %v1064, %v1128
    %v1161 = vmul.f32 %v1065, %v1129
    %v1162 = vmul.f32 %v1066, %v1130
    %v1163 = vmul.f32 %v1067, %v1131
    %v1164 = vmul.f32 %v1068, %v1132
    %v1165 = vmul.f32 %v1069, %v1133
    %v1166 = vmul.f32 %v1070, %v1134
    %v1167 = vmul.f32 %v1071, %v1135
    %v1168 = vmul.f32 %v1072, %v1136
    %v1169 = vmul.f32 %v1073, %v1137
    %v1170 = vmul.f32 %v1074, %v1138
    %v1171 = vmul.f32 %v1075, %v1139
    %v1172 = vmul.f32 %v1076, %v1140
    %v1173 = vmul.f32 %v1077, %v1141
    %v1174 = vmul.f32 %v1078, %v1142
    %v1175 = vmul.f32 %v1079, %v1143
    %v1176 = vmul.f32 %v1080, %v1144
    %v1177 = vmul.f32 %v1081, %v1145
    %v1178 = vmul.f32 %v1082, %v1146
    %v1179 = vmul.f32 %v1083, %v1147
    %v1180 = vmul.f32 %v893, %v1148
    %v1181 = vmul.f32 %v895, %v1149
    %v1182 = vmul.f32 %v897, %v1150
    %v1183 = vmul.f32 %v899, %v1151
    %v1184 = vmul.f32 %v901, %v1152
    %v1185 = vmul.f32 %v903, %v1153
    %v1186 = vmul.f32 %v905, %v1154
    %v1187 = vmul.f32 %v907, %v1155
    %v1188 = vmul.f32 %v909, %v1156
    %v1189 = vmul.f32 %v911, %v1157
    %v1190 = vmul.f32 %v913, %v1158
    %v1191 = vmul.f32 %v915, %v1159
    %v1192 = vmul.f32 %v917, %v1160
    %v1193 = vmul.f32 %v919, %v1161
    %v1194 = vmul.f32 %v921, %v1162
    %v1195 = vmul.f32 %v923, %v1163
    %v1196 = vmul.f32 %v925, %v1164
    %v1197 = vmul.f32 %v927, %v1165
    %v1198 = vmul.f32 %v929, %v1166
    %v1199 = vmul.f32 %v931, %v1167
    %v1200 = vmul.f32 %v933, %v1168
    %v1201 = vmul.f32 %v935, %v1169
    %v1202 = vmul.f32 %v937, %v1170
    %v1203 = vmul.f32 %v939, %v1171
    %v1204 = vmul.f32 %v941, %v1172
    %v1205 = vmul.f32 %v943, %v1173
    %v1206 = vmul.f32 %v945, %v1174
    %v1207 = vmul.f32 %v947, %v1175
    %v1208 = vmul.f32 %v949, %v1176
    %v1209 = vmul.f32 %v951, %v1177
    %v1210 = vmul.f32 %v953, %v1178
    %v1211 = vmul.f32 %v955, %v1179
    %1212 = vst.msk [vmem:[%s9] sm:$0xff] %vm763, %v1180
    %1213 = vst.msk [vmem:[%s9 + $0x8] sm:$0xff] %vm763, %v1181
    %1214 = vst.msk [vmem:[%s9 + $0x10] sm:$0xff] %vm763, %v1182
    %1215 = vst.msk [vmem:[%s9 + $0x18] sm:$0xff] %vm763, %v1183
    %1216 = vst.msk [vmem:[%s9 + $0x20] sm:$0xff] %vm763, %v1184
    %1217 = vst.msk [vmem:[%s9 + $0x28] sm:$0xff] %vm763, %v1185
    %1218 = vst.msk [vmem:[%s9 + $0x30] sm:$0xff] %vm763, %v1186
    %1219 = vst.msk [vmem:[%s9 + $0x38] sm:$0xff] %vm763, %v1187
    %1220 = vst.msk [vmem:[%s9 + $0x40] sm:$0xff] %vm763, %v1188
    %1221 = vst.msk [vmem:[%s9 + $0x48] sm:$0xff] %vm763, %v1189
    %1222 = vst.msk [vmem:[%s9 + $0x50] sm:$0xff] %vm763, %v1190
    %1223 = vst.msk [vmem:[%s9 + $0x58] sm:$0xff] %vm763, %v1191
    %1224 = vst.msk [vmem:[%s9 + $0x60] sm:$0xff] %vm763, %v1192
    %1225 = vst.msk [vmem:[%s9 + $0x68] sm:$0xff] %vm763, %v1193
    %1226 = vst.msk [vmem:[%s9 + $0x70] sm:$0xff] %vm763, %v1194
    %1227 = vst.msk [vmem:[%s9 + $0x78] sm:$0xff] %vm763, %v1195
    %1228 = vst.msk [vmem:[%s9 + $0x80] sm:$0xff] %vm763, %v1196
    %1229 = vst.msk [vmem:[%s9 + $0x88] sm:$0xff] %vm763, %v1197
    %1230 = vst.msk [vmem:[%s9 + $0x90] sm:$0xff] %vm763, %v1198
    %1231 = vst.msk [vmem:[%s9 + $0x98] sm:$0xff] %vm763, %v1199
    %1232 = vst.msk [vmem:[%s9 + $0xa0] sm:$0xff] %vm763, %v1200
    %1233 = vst.msk [vmem:[%s9 + $0xa8] sm:$0xff] %vm763, %v1201
    %1234 = vst.msk [vmem:[%s9 + $0xb0] sm:$0xff] %vm763, %v1202
    %1235 = vst.msk [vmem:[%s9 + $0xb8] sm:$0xff] %vm763, %v1203
    %1236 = vst.msk [vmem:[%s9 + $0xc0] sm:$0xff] %vm763, %v1204
    %1237 = vst.msk [vmem:[%s9 + $0xc8] sm:$0xff] %vm763, %v1205
    %1238 = vst.msk [vmem:[%s9 + $0xd0] sm:$0xff] %vm763, %v1206
    %1239 = vst.msk [vmem:[%s9 + $0xd8] sm:$0xff] %vm763, %v1207
    %1240 = vst.msk [vmem:[%s9 + $0xe0] sm:$0xff] %vm763, %v1208
    %1241 = vst.msk [vmem:[%s9 + $0xe8] sm:$0xff] %vm763, %v1209
    %1242 = vst.msk [vmem:[%s9 + $0xf0] sm:$0xff] %vm763, %v1210
    %1243 = vst.msk [vmem:[%s9 + $0xf8] sm:$0xff] %vm763, %v1211
    // Predicated region
    $region30: #{tpu_custom_call.1} parent=1 // pred_check
      _
    $region31: #{tpu_custom_call.1} parent=1 // pred_check_branch
      %1245 = sbr.rel (0) target = $region33
    $region32: #{tpu_custom_call.1} parent=1 // pred_region
      %1247 = vsyncadd [#allocation3], 0
      %s1248 = sshll.u32 [#allocation2], 4
      %s1249 = int_to_ptr.vmem [resolvable:$true] %s1248
      %s1250 = sshll.u32 %s7, 4
      %s1251 = int_to_ptr.hbm [resolvable:$true] %s1250
      %1256 = dma.vmem_to_hbm [thread:$0]  %s1249, 4096, %s1251, [#allocation3], 128, 128, 8
    $region33: #{tpu_custom_call.1} parent=1 // pred_fallthru
      _
    // Predicated region
    $region34: #{tpu_custom_call.1} parent=1 // pred_check
      _
    $region35: #{tpu_custom_call.1} parent=1 // pred_check_branch
      %1258 = sbr.rel (0) target = $region37
    $region36: #{tpu_custom_call.1} parent=1 // pred_region
      _
    $region37: #{tpu_custom_call.1} parent=1 // pred_fallthru
      _
    // Predicated region
    $region38: #{tpu_custom_call.1} parent=1 // pred_check
      _
    $region39: #{tpu_custom_call.1} parent=1 // pred_check_branch
      %1260 = sbr.rel (0) target = $region41
    $region40: #{tpu_custom_call.1} parent=1 // pred_region
      _
    $region41: #{tpu_custom_call.1} parent=1 // pred_fallthru
      _
    // Predicated region
    $region42: #{tpu_custom_call.1} parent=1 // pred_check
      _
    $region43: #{tpu_custom_call.1} parent=1 // pred_check_branch
      %1262 = sbr.rel (0) target = $region45
    $region44: #{tpu_custom_call.1} parent=1 // pred_region
      %1264 = dma.done [#allocation3], 4096
    $region45: #{tpu_custom_call.1} parent=1 // pred_fallthru
      _
    // Predicated region
    $region46: #{tpu_custom_call.1} parent=1 // pred_check
      _
    $region47: #{tpu_custom_call.1} parent=1 // pred_check_branch
      %1266 = sbr.rel (0) target = $region49
    $region48: #{tpu_custom_call.1} parent=1 // pred_region
      _
    $region49: #{tpu_custom_call.1} parent=1 // pred_fallthru
      _
    // Predicated region
    $region50: #{tpu_custom_call.1} parent=1 // pred_check
      _
    $region51: #{tpu_custom_call.1} parent=1 // pred_check_branch
      %1268 = sbr.rel (0) target = $region53
    $region52: #{tpu_custom_call.1} parent=1 // pred_region
      _
    $region53: #{tpu_custom_call.1} parent=1 // pred_fallthru
      _
    %1269 = vsyncpa [#allocation3], 1

</llo_original>
